<compile_context>
chip_gen: v5e
topology: v5e:2x2
jax: 0.10.0
libtpu: 0.0.40
codegen_flags: <defaults>
</compile_context>

<pallas_src>
import jax
import jax.numpy as jnp
from jax.experimental import pallas as pl
from jax.experimental.pallas import tpu as pltpu


def _make_kernel(n, c_out):
    def kernel(x_ref, wbd_ref, o_ref):
        # One consolidated MXU matmul:
        #   wbd = block_diag(W^T, ..., W^T)        (N*C_out, N*C_in)
        #   x   = x.reshape(N*C_in, L)             (N*C_in, L)
        #   res[16*i:16*(i+1), :] == v1[i] (= W^T @ x[i]), bias omitted (cancels
        #   exactly inside the dim-0 softmax).
        res = jnp.dot(wbd_ref[...], x_ref[...],
                      preferred_element_type=jnp.float32)   # (N*C_out, L)

        # Static, sublane-aligned per-batch slabs (C_out=16 is a multiple of 8).
        slabs = [res[i * c_out:(i + 1) * c_out, :] for i in range(n)]

        # Softmax over dim 0 of cat((v1, v1)): for each (c, l) column
        #   m = max_n v1,  s = sum_n exp(v1 - m)
        #   max_n v2 = 1 / (2 s)                  (since max_n exp(v1 - m) = 1)
        #   min_n v2 = min_n exp(v1 - m) / (2 s)
        m = slabs[0]
        for v in slabs[1:]:
            m = jnp.maximum(m, v)

        e = jnp.exp(slabs[0] - m)
        s = e
        emin = e
        for v in slabs[1:]:
            e = jnp.exp(v - m)
            s = s + e
            emin = jnp.minimum(emin, e)

        inv2s = 0.5 / s                 # exact divide: 2 vregs, well within tolerance
        v3 = jnp.max(inv2s)             # global max of v2
        v4 = jnp.min(emin * inv2s)      # global min of v2
        v5 = v3 + v4
        o_ref[0, 0] = (v5 * v4) * v5

    return kernel


def model_forward(x, w, b):
    """x: (N, C_in, L) f32; w: (C_in, C_out); b: (C_out,). Returns scalar f32.

    The bias is intentionally unused in the kernel: it is constant along the
    softmax dim-0 and cancels exactly.
    """
    del b  # cancels inside Softmax(dim=0)
    n, c_in, l = x.shape
    c_out = w.shape[1]

    # Free (contiguous, layout-preserving) view: (N, C_in, L) -> (N*C_in, L).
    x_flat = x.reshape(n * c_in, l)
    # Block-diagonal kron(I_N, W^T): (N*C_out, N*C_in).  Weights are static, so in a
    # real deployment this is precomputed/folded once.
    wbd = jnp.kron(jnp.eye(n, dtype=w.dtype), w.T)

    out = pl.pallas_call(
        _make_kernel(n, c_out),
        out_shape=jax.ShapeDtypeStruct((1, 1), jnp.float32),
        in_specs=[
            pl.BlockSpec(memory_space=pltpu.MemorySpace.VMEM),  # x_flat (N*C_in, L)
            pl.BlockSpec(memory_space=pltpu.MemorySpace.VMEM),  # wbd (N*C_out, N*C_in)
        ],
        out_specs=pl.BlockSpec(memory_space=pltpu.MemorySpace.SMEM),
    )(x_flat, wbd)
    return out[0, 0]


def _reference(x, w, b):
    # pure-JAX reference of the same math (bias included, faithful to the module)
    v1 = jnp.einsum("nil,io->nol", x, w) + b[None, :, None]   # (N, C_out, L)
    z = jnp.concatenate([v1, v1], axis=0)                     # (2N, C_out, L)
    v2 = jax.nn.softmax(z, axis=0)
    v3 = jnp.max(v2)
    v4 = jnp.min(v2)
    v5 = v3 + v4
    return (v5 * v4) * v5


if __name__ == "__main__":
    key = jax.random.PRNGKey(0)
    kx, kw, kb = jax.random.split(key, 3)

    N, C, L = 4, 16, 128          # channels fixed at 16 by the module; small N/L
    x = jax.random.normal(kx, (N, C, L), dtype=jnp.float32)
    # ConvTranspose1d(16, 16, k=1) weight is (C_in, C_out, 1); we use (C_in, C_out)
    bound = 1.0 / (C ** 0.5)
    w = jax.random.uniform(kw, (C, C), minval=-bound, maxval=bound, dtype=jnp.float32)
    b = jax.random.uniform(kb, (C,), minval=-bound, maxval=bound, dtype=jnp.float32)

    out = model_forward(x, w, b)
    jax.block_until_ready(out)

    ref = _reference(x, w, b)
    assert jnp.allclose(out, ref, rtol=1e-5, atol=1e-6), (out, ref)

    print("KERNEL_OK")
</pallas_src>

<mosaic_0001>
module attributes {stable_mosaic.version = 11 : i64} {
  func.func @kernel(%arg0: memref<64x128xf32, #tpu.memory_space<vmem>>, %arg1: memref<64x64xf32, #tpu.memory_space<vmem>>, %arg2: memref<1x1xf32, #tpu.memory_space<smem>>) attributes {dimension_semantics = [], scalar_prefetch = 0 : i64, scratch_operands = 0 : i64, tpu.core_type = #tpu.core_type<tc>} {
    %c0 = arith.constant 0 : index
    %c0_0 = arith.constant 0 : index
    %0 = vector.load %arg1[%c0, %c0_0] : memref<64x64xf32, #tpu.memory_space<vmem>>, vector<64x64xf32>
    %c0_1 = arith.constant 0 : index
    %c0_2 = arith.constant 0 : index
    %1 = vector.load %arg0[%c0_1, %c0_2] : memref<64x128xf32, #tpu.memory_space<vmem>>, vector<64x128xf32>
    %cst = arith.constant dense<0.000000e+00> : vector<64x128xf32>
    %2 = tpu.matmul %0, %1, %cst {dimension_numbers = #tpu.dot_dimension_numbers<[1], [0], [0], [1], [0, 0, 1, 1], [], []>} : vector<64x64xf32>, vector<64x128xf32>, vector<64x128xf32> -> vector<64x128xf32>
    %3 = vector.extract_strided_slice %2 {offsets = [0, 0], sizes = [16, 128], strides = [1, 1]} : vector<64x128xf32> to vector<16x128xf32>
    %4 = vector.extract_strided_slice %2 {offsets = [16, 0], sizes = [16, 128], strides = [1, 1]} : vector<64x128xf32> to vector<16x128xf32>
    %5 = vector.extract_strided_slice %2 {offsets = [32, 0], sizes = [16, 128], strides = [1, 1]} : vector<64x128xf32> to vector<16x128xf32>
    %6 = vector.extract_strided_slice %2 {offsets = [48, 0], sizes = [16, 128], strides = [1, 1]} : vector<64x128xf32> to vector<16x128xf32>
    %7 = arith.maximumf %3, %4 : vector<16x128xf32>
    %8 = arith.maximumf %7, %5 : vector<16x128xf32>
    %9 = arith.maximumf %8, %6 : vector<16x128xf32>
    %10 = arith.subf %3, %9 : vector<16x128xf32>
    %11 = math.exp %10 : vector<16x128xf32>
    %12 = arith.subf %4, %9 : vector<16x128xf32>
    %13 = math.exp %12 : vector<16x128xf32>
    %14 = arith.addf %11, %13 : vector<16x128xf32>
    %15 = arith.minimumf %11, %13 : vector<16x128xf32>
    %16 = arith.subf %5, %9 : vector<16x128xf32>
    %17 = math.exp %16 : vector<16x128xf32>
    %18 = arith.addf %14, %17 : vector<16x128xf32>
    %19 = arith.minimumf %15, %17 : vector<16x128xf32>
    %20 = arith.subf %6, %9 : vector<16x128xf32>
    %21 = math.exp %20 : vector<16x128xf32>
    %22 = arith.addf %18, %21 : vector<16x128xf32>
    %23 = arith.minimumf %19, %21 : vector<16x128xf32>
    %cst_3 = arith.constant 5.000000e-01 : f32
    %24 = vector.broadcast %cst_3 : f32 to vector<16x128xf32>
    %25 = arith.divf %24, %22 : vector<16x128xf32>
    %26 = vector.shape_cast %25 : vector<16x128xf32> to vector<1x16x128xf32>
    %cst_4 = arith.constant dense<0xFF800000> : vector<1xf32>
    %27 = vector.multi_reduction <maximumf>, %26, %cst_4 [1, 2] : vector<1x16x128xf32> to vector<1xf32>
    %28 = vector.shape_cast %27 : vector<1xf32> to vector<1x1x1xf32>
    %29 = vector.extract %28[0, 0, 0] : f32 from vector<1x1x1xf32>
    %30 = arith.mulf %23, %25 : vector<16x128xf32>
    %31 = vector.shape_cast %30 : vector<16x128xf32> to vector<1x16x128xf32>
    %cst_5 = arith.constant dense<0x7F800000> : vector<1xf32>
    %32 = vector.multi_reduction <minimumf>, %31, %cst_5 [1, 2] : vector<1x16x128xf32> to vector<1xf32>
    %33 = vector.shape_cast %32 : vector<1xf32> to vector<1x1x1xf32>
    %34 = vector.extract %33[0, 0, 0] : f32 from vector<1x1x1xf32>
    %35 = arith.addf %29, %34 : f32
    %36 = arith.mulf %35, %34 : f32
    %37 = arith.mulf %36, %35 : f32
    %c0_6 = arith.constant 0 : index
    %c0_7 = arith.constant 0 : index
    %38 = memref.load %arg2[%c0_6, %c0_7] : memref<1x1xf32, #tpu.memory_space<smem>>
    memref.store %37, %arg2[%c0_6, %c0_7] : memref<1x1xf32, #tpu.memory_space<smem>>
    return
  }
}

</mosaic_0001>

<llo_original>
// kernel: tpu_custom_call.1
$region0: #{tpu_custom_call.1}
  #allocation0 [shape = 'u32[]', space=smem, size = 0x4, offset = 0x4, fixed_abs, tag = 'smem constant byte address 0x4 - core index']
  #allocation1 [shape = 'u32[72,128]{1,0:T(1,128)}', space=vmem, size = 0x9000, scoped, tag = 'internal scratch']
  %s0 = inlined_call_operand.hbm [shape: f32[64,128], index: 0, kind: input, shape index: {}]
  %s1 = inlined_call_operand.hbm [shape: f32[64,64], index: 1, kind: input, shape index: {}]
  %s2 = inlined_call_operand.hbm [shape: f32[1,1], index: 2, kind: output, shape index: {}]
  %s3 = sld [smem:[#allocation0]]
  $region26: #{tpu_custom_call.1} parent=0
    _
  %s5 = ssub.s32 1, %s3
  %s6 = scalar_select 0, %s5, %s3
  $region1: #{tpu_custom_call.1} parent=0
    #allocation2 [shape = 'u8[32768]{0}', space=vmem, size = 0x8000, scoped, tag = 'input window, operand 0, single buffered']
    #allocation3 [shape = 's32[1]{0}', space=sflag, size = 0x4, scoped, tag = 'scoped memory for tpu_custom_call.1']
    #allocation4 [shape = 's32[1]{0}', space=sflag, size = 0x4, scoped, tag = 'scoped memory for tpu_custom_call.1']
    #allocation5 [shape = 'u8[32768]{0}', space=vmem, size = 0x8000, scoped, tag = 'input window, operand 1, single buffered']
    #allocation6 [shape = 's32[1]{0}', space=sflag, size = 0x4, scoped, tag = 'scoped memory for tpu_custom_call.1']
    #allocation7 [shape = 'u8[512]{0}', space=smem, size = 0x200, scoped, tag = 'output window, operand 0, single buffered']
    %7 = vsyncpa [#allocation3], 0
    %8 = vsyncpa [#allocation6], 0
    %9 = vsyncpa [#allocation4], 0
    // Predicated region
    $region2: #{tpu_custom_call.1} parent=1 // pred_check
      _
    $region3: #{tpu_custom_call.1} parent=1 // pred_check_branch
      %11 = sbr.rel (0) target = $region5
    $region4: #{tpu_custom_call.1} parent=1 // pred_region
      %13 = vsyncadd [#allocation3], 0
      %s14 = sshll.u32 %s0, 4
      %s15 = int_to_ptr.hbm [resolvable:$true] %s14
      %s16 = sshll.u32 [#allocation2], 4
      %s17 = int_to_ptr.vmem [resolvable:$true] %s16
      %22 = dma.hbm_to_vmem [thread:$0]  %s15, 1024, %s17, [#allocation3], 128, 128, 8
    $region5: #{tpu_custom_call.1} parent=1 // pred_fallthru
      _
    // Predicated region
    $region6: #{tpu_custom_call.1} parent=1 // pred_check
      _
    $region7: #{tpu_custom_call.1} parent=1 // pred_check_branch
      %24 = sbr.rel (0) target = $region9
    $region8: #{tpu_custom_call.1} parent=1 // pred_region
      %26 = vsyncadd [#allocation6], 0
      %s27 = sshll.u32 %s1, 4
      %s28 = int_to_ptr.hbm [resolvable:$true] %s27
      %s29 = sshll.u32 [#allocation5], 4
      %s30 = int_to_ptr.vmem [resolvable:$true] %s29
      %35 = dma.hbm_to_vmem [thread:$0]  %s28, 1024, %s30, [#allocation6], 128, 128, 8
    $region9: #{tpu_custom_call.1} parent=1 // pred_fallthru
      _
    // Predicated region
    $region10: #{tpu_custom_call.1} parent=1 // pred_check
      _
    $region11: #{tpu_custom_call.1} parent=1 // pred_check_branch
      %37 = sbr.rel (0) target = $region13
    $region12: #{tpu_custom_call.1} parent=1 // pred_region
      %39 = dma.done [#allocation3], 1024
    $region13: #{tpu_custom_call.1} parent=1 // pred_fallthru
      _
    // Predicated region
    $region14: #{tpu_custom_call.1} parent=1 // pred_check
      _
    $region15: #{tpu_custom_call.1} parent=1 // pred_check_branch
      %41 = sbr.rel (0) target = $region17
    $region16: #{tpu_custom_call.1} parent=1 // pred_region
      %43 = dma.done [#allocation6], 1024
    $region17: #{tpu_custom_call.1} parent=1 // pred_fallthru
      _
    %v44 = vld [vmem:[#allocation5] sm:$0xff]
    %v45 = vld [vmem:[#allocation5 + $0x8] sm:$0xff]
    %v46 = vld [vmem:[#allocation5 + $0x10] sm:$0xff]
    %v47 = vld [vmem:[#allocation5 + $0x18] sm:$0xff]
    %v48 = vld [vmem:[#allocation5 + $0x20] sm:$0xff]
    %v49 = vld [vmem:[#allocation5 + $0x28] sm:$0xff]
    %v50 = vld [vmem:[#allocation5 + $0x30] sm:$0xff]
    %v51 = vld [vmem:[#allocation5 + $0x38] sm:$0xff]
    %v52 = vld [vmem:[#allocation2] sm:$0xff]
    %v53 = vld [vmem:[#allocation2 + $0x8] sm:$0xff]
    %v54 = vld [vmem:[#allocation2 + $0x10] sm:$0xff]
    %v55 = vld [vmem:[#allocation2 + $0x18] sm:$0xff]
    %v56 = vld [vmem:[#allocation2 + $0x20] sm:$0xff]
    %v57 = vld [vmem:[#allocation2 + $0x28] sm:$0xff]
    %v58 = vld [vmem:[#allocation2 + $0x30] sm:$0xff]
    %v59 = vld [vmem:[#allocation2 + $0x38] sm:$0xff]
    %vm60 = vcmask 523264
    %v62 = vsel %vm60, %v44, 0
    %v65 = vsel %vm60, %v45, 0
    %v68 = vsel %vm60, %v46, 0
    %v71 = vsel %vm60, %v47, 0
    %v74 = vsel %vm60, %v48, 0
    %v77 = vsel %vm60, %v49, 0
    %v80 = vsel %vm60, %v50, 0
    %v83 = vsel %vm60, %v51, 0
    %85 = vmatpush.msra.mxu0 0.0
    %86 = vmatpush.msra.mxu0 0.0
    %87 = vmatpush.msra.mxu0 0.0
    %88 = vmatpush.msra.mxu0 0.0
    %89 = vmatpush.msra.mxu0 0.0
    %90 = vmatpush.msra.mxu0 0.0
    %91 = vmatpush.msra.mxu0 0.0
    %92 = vmatpush.msra.mxu0 0.0
    %93 = vmatpush.msra.mxu0 %v59
    %94 = vmatpush.msra.mxu0 %v58
    %95 = vmatpush.msra.mxu0 %v57
    %96 = vmatpush.msra.mxu0 %v56
    %97 = vmatpush.msra.mxu0 %v55
    %98 = vmatpush.msra.mxu0 %v54
    %99 = vmatpush.msra.mxu0 %v53
    %100 = vmatpush.msra.mxu0 %v52
    %101 = vmatmul.f32.gmra.mxu0 %v62
    %v102 = vpop.f32.mrf.mxu0
    %v103 = vadd.f32 0.0, %v102
    %104 = vmatmul.f32.gmra.mxu0 %v65
    %v105 = vpop.f32.mrf.mxu0
    %v106 = vadd.f32 0.0, %v105
    %107 = vmatmul.f32.gmra.mxu0 %v68
    %v108 = vpop.f32.mrf.mxu0
    %v109 = vadd.f32 0.0, %v108
    %110 = vmatmul.f32.gmra.mxu0 %v71
    %v111 = vpop.f32.mrf.mxu0
    %v112 = vadd.f32 0.0, %v111
    %113 = vmatmul.f32.gmra.mxu0 %v74
    %v114 = vpop.f32.mrf.mxu0
    %v115 = vadd.f32 0.0, %v114
    %116 = vmatmul.f32.gmra.mxu0 %v77
    %v117 = vpop.f32.mrf.mxu0
    %v118 = vadd.f32 0.0, %v117
    %119 = vmatmul.f32.gmra.mxu0 %v80
    %v120 = vpop.f32.mrf.mxu0
    %v121 = vadd.f32 0.0, %v120
    %122 = vmatmul.f32.gmra.mxu0 %v83
    %v123 = vpop.f32.mrf.mxu0
    %v124 = vadd.f32 0.0, %v123
    %125 = vdwg.mxu0
    %v126 = vmax.f32 %v103, %v109
    %v127 = vmax.f32 %v106, %v112
    %v128 = vmax.f32 %v126, %v115
    %v129 = vmax.f32 %v127, %v118
    %v130 = vmax.f32 %v128, %v121
    %v131 = vmax.f32 %v129, %v124
    %v132 = vsub.f32 %v103, %v130
    %v133 = vsub.f32 %v106, %v131
    %v134 = vmul.f32 %v132, 1.442695
    %v135 = vpow.pop %v134
    %v136 = vmul.f32 %v133, 1.442695
    %v137 = vpow.pop %v136
    %v138 = vsub.f32 %v109, %v130
    %v139 = vsub.f32 %v112, %v131
    %v140 = vmul.f32 %v138, 1.442695
    %v141 = vpow.pop %v140
    %v142 = vmul.f32 %v139, 1.442695
    %v143 = vpow.pop %v142
    %v144 = vadd.f32 %v135, %v141
    %v145 = vadd.f32 %v137, %v143
    %v146 = vmin.f32 %v135, %v141
    %v147 = vmin.f32 %v137, %v143
    %v148 = vsub.f32 %v115, %v130
    %v149 = vsub.f32 %v118, %v131
    %v150 = vmul.f32 %v148, 1.442695
    %v151 = vpow.pop %v150
    %v152 = vmul.f32 %v149, 1.442695
    %v153 = vpow.pop %v152
    %v154 = vadd.f32 %v144, %v151
    %v155 = vadd.f32 %v145, %v153
    %v156 = vmin.f32 %v146, %v151
    %v157 = vmin.f32 %v147, %v153
    %v158 = vsub.f32 %v121, %v130
    %v159 = vsub.f32 %v124, %v131
    %v160 = vmul.f32 %v158, 1.442695
    %v161 = vpow.pop %v160
    %v162 = vmul.f32 %v159, 1.442695
    %v163 = vpow.pop %v162
    %v164 = vadd.f32 %v154, %v161
    %v165 = vadd.f32 %v155, %v163
    %v166 = vmin.f32 %v156, %v161
    %v167 = vmin.f32 %v157, %v163
    %v168 = vrcp.pop %v164
    %v169 = vmul.f32 %v164, %v168
    %v170 = vsub.f32 1.0, %v169
    %v171 = vmul.f32 %v168, %v170
    %v172 = vadd.f32 %v168, %v171
    %vm173 = vweird.f32 %v164
    %vm174 = vweird.f32 %v168
    %vm175 = vmor %vm173, %vm174
    %v176 = vsel %vm175, %v168, %v172
    %v177 = vand.u32 2147483647, %v164
    %vm178 = vcmp.eq.f32.partialorder %v177, 8.507059e+37
    %v179 = vand.u32 %v164, 2147483648
    %v180 = vor.u32 1.1754944e-38, %v179
    %v181 = vsel %vm178, %v180, %v176
    %v182 = vmul.f32 0.5, %v181
    %v183 = vrcp.pop %v165
    %v184 = vmul.f32 %v165, %v183
    %v185 = vsub.f32 1.0, %v184
    %v186 = vmul.f32 %v183, %v185
    %v187 = vadd.f32 %v183, %v186
    %vm188 = vweird.f32 %v165
    %vm189 = vweird.f32 %v183
    %vm190 = vmor %vm188, %vm189
    %v191 = vsel %vm190, %v183, %v187
    %v192 = vand.u32 2147483647, %v165
    %vm193 = vcmp.eq.f32.partialorder %v192, 8.507059e+37
    %v194 = vand.u32 %v165, 2147483648
    %v195 = vor.u32 1.1754944e-38, %v194
    %v196 = vsel %vm193, %v195, %v191
    %v197 = vmul.f32 0.5, %v196
    %v198 = vmax.f32 %v182, %v197
    %199 = vmax.xlane.f32.xlu0 %v198
    %v200 = vpop.xlane.xlu0 %199
    %v201 = vrot.slane %v200, 4
    %v202 = vmax.f32 %v200, %v201
    %v203 = vrot.slane %v202, 2
    %v204 = vmax.f32 %v202, %v203
    %v205 = vrot.slane %v204, 1
    %v206 = vmax.f32 %v204, %v205
    %s207 = vtos %v206
    %v208 = vmul.f32 %v166, %v182
    %v209 = vmul.f32 %v167, %v197
    %v210 = vmin.f32 %v208, %v209
    %211 = vmin.xlane.f32.xlu0 %v210
    %v212 = vpop.xlane.xlu0 %211
    %v213 = vrot.slane %v212, 4
    %v214 = vmin.f32 %v212, %v213
    %v215 = vrot.slane %v214, 2
    %v216 = vmin.f32 %v214, %v215
    %v217 = vrot.slane %v216, 1
    %v218 = vmin.f32 %v216, %v217
    %s219 = vtos %v218
    %s220 = sadd.f32 %s207, %s219
    %s221 = smul.f32 %s220, %s219
    %s222 = smul.f32 %s221, %s220
    %s223 = scalar_lea.smem [#allocation7], 0
    %224 = sst [smem:[%s223]] %s222
    // Predicated region
    $region18: #{tpu_custom_call.1} parent=1 // pred_check
      _
    $region19: #{tpu_custom_call.1} parent=1 // pred_check_branch
      %226 = sbr.rel (0) target = $region21
    $region20: #{tpu_custom_call.1} parent=1 // pred_region
      %228 = vsyncadd [#allocation4], 0
      %s230 = sshll.u32 %s2, 4
      %s231 = int_to_ptr.hbm [resolvable:$true] %s230
      %233 = dma.smem_to_hbm [#allocation7], 16, %s231, [#allocation4]
    $region21: #{tpu_custom_call.1} parent=1 // pred_fallthru
      _
    // Predicated region
    $region22: #{tpu_custom_call.1} parent=1 // pred_check
      _
    $region23: #{tpu_custom_call.1} parent=1 // pred_check_branch
      %235 = sbr.rel (0) target = $region25
    $region24: #{tpu_custom_call.1} parent=1 // pred_region
      %237 = dma.done [#allocation4], 16
    $region25: #{tpu_custom_call.1} parent=1 // pred_fallthru
      _
    %238 = sfence
    %239 = vsyncpa [#allocation3], 1
    %240 = vsyncpa [#allocation6], 1
    %241 = vsyncpa [#allocation4], 1

</llo_original>
